<compile_context>
chip_gen: v5e
topology: v5e:2x2
jax: 0.10.0
libtpu: 0.0.40
codegen_flags: <defaults>
</compile_context>

<pallas_src>
import jax
import jax.numpy as jnp
from jax.experimental import pallas as pl
from jax.experimental.pallas import tpu as pltpu

K_CHEB = 3  # ChebConv(K=2) -> 3 polynomial terms (T0=I, T1=L, T2=2L^2-I)


def _res_cheb_gc_diff_kernel(
    x_ref,     # (M, Cin)      M = B*N, batch flattened into rows
    ts_ref,    # (2*M, M)      [kron(I_B, T1); kron(I_B, T2)] stacked on rows
    w1_ref,    # (K_CHEB, Cin, H)
    b1_ref,    # (1, H)
    tp_ref,    # (M, H)        temb_proj(silu(temb)), pre-broadcast over nodes
    w2_ref,    # (K_CHEB, H, Cout)
    b2_ref,    # (1, Cout)
    out_ref,   # (M, Cout)
):
    x = x_ref[...]                       # [M, Cin]
    m = x.shape[0]

    # ---- gconv1: ChebConv(Cin -> H) + ReLU -------------------------------
    # One stacked graph matmul gives T1@x[b] and T2@x[b] for every batch
    # element at once; the T0 = I term folds into the accumulator init.
    r = jnp.dot(ts_ref[...], x, preferred_element_type=jnp.float32)      # [2M, Cin]
    acc1 = jnp.dot(x, w1_ref[0], preferred_element_type=jnp.float32)     # k = 0
    acc1 = acc1 + jnp.dot(r[:m], w1_ref[1], preferred_element_type=jnp.float32)
    acc1 = acc1 + jnp.dot(r[m:], w1_ref[2], preferred_element_type=jnp.float32)
    h = jnp.maximum(acc1 + b1_ref[...], 0.0)     # ReLU (dropout = identity at inference)
    h = h + tp_ref[...]                          # + temb projection (broadcast done in wrapper)

    # ---- gconv2: ChebConv(H -> Cout) + ReLU ------------------------------
    r2 = jnp.dot(ts_ref[...], h, preferred_element_type=jnp.float32)     # [2M, H]
    acc2 = jnp.dot(h, w2_ref[0], preferred_element_type=jnp.float32)
    acc2 = acc2 + jnp.dot(r2[:m], w2_ref[1], preferred_element_type=jnp.float32)
    acc2 = acc2 + jnp.dot(r2[m:], w2_ref[2], preferred_element_type=jnp.float32)
    g = jnp.maximum(acc2 + b2_ref[...], 0.0)

    # ---- residual ---------------------------------------------------------
    out_ref[...] = (x + g).astype(out_ref.dtype)


def cheb_basis(adj):
    """Normalized graph Laplacian and its Chebyshev polynomials (T0, T1, T2)."""
    n = adj.shape[0]
    deg = jnp.sum(adj, axis=-1)
    d = jnp.where(deg > 0, deg ** (-0.5), 0.0)   # guard zero-degree nodes
    dmat = jnp.diag(d)
    lap = jnp.eye(n, dtype=adj.dtype) - dmat @ adj @ dmat
    t0 = jnp.eye(n, dtype=adj.dtype)
    t1 = lap
    t2 = 2.0 * (lap @ lap) - jnp.eye(n, dtype=adj.dtype)
    return jnp.stack([t0, t1, t2], axis=0)       # [3, N, N]


@jax.jit
def res_cheb_gc_diff(x, temb, adj, w1, b1, wt, bt, w2, b2):
    B, N, Cin = x.shape
    H = w1.shape[-1]
    Cout = w2.shape[-1]
    M = B * N

    # --- glue (plain JAX, tiny) -------------------------------------------
    cheb = cheb_basis(adj)                                    # [3, N, N]
    eye_b = jnp.eye(B, dtype=x.dtype)
    # Block-diagonal (over batch) T1 and T2, stacked on rows: [2*M, M].
    tstack = jnp.concatenate(
        [jnp.kron(eye_b, cheb[1]), jnp.kron(eye_b, cheb[2])], axis=0)

    x2 = x.reshape(M, Cin)                                    # batch folded into rows
    # Hoisted temb projection: one batched [B,E]@[E,H] matmul in XLA.
    tproj = jax.nn.silu(temb) @ wt + bt                       # [B, H]
    tp_rows = jnp.repeat(tproj, N, axis=0)                    # [M, H]

    out2 = pl.pallas_call(
        _res_cheb_gc_diff_kernel,
        out_shape=jax.ShapeDtypeStruct((M, Cout), x.dtype),
        grid_spec=pltpu.PrefetchScalarGridSpec(
            num_scalar_prefetch=0,
            grid=(1,),                                        # single invocation, whole batch
            in_specs=[
                pl.BlockSpec((M, Cin), lambda i: (0, 0)),             # x (flattened)
                pl.BlockSpec((2 * M, M), lambda i: (0, 0)),           # stacked T1/T2
                pl.BlockSpec((K_CHEB, Cin, H), lambda i: (0, 0, 0)),  # W1
                pl.BlockSpec((1, H), lambda i: (0, 0)),               # b1
                pl.BlockSpec((M, H), lambda i: (0, 0)),               # temb proj rows
                pl.BlockSpec((K_CHEB, H, Cout), lambda i: (0, 0, 0)), # W2
                pl.BlockSpec((1, Cout), lambda i: (0, 0)),            # b2
            ],
            out_specs=pl.BlockSpec((M, Cout), lambda i: (0, 0)),
        ),
        compiler_params=pltpu.CompilerParams(
            dimension_semantics=("arbitrary",),
            vmem_limit_bytes=16 * 1024 * 1024,   # working set is <100 KB
        ),
    )(x2, tstack, w1, b1.reshape(1, H), tp_rows, w2, b2.reshape(1, Cout))

    return out2.reshape(B, N, Cout)


def reference(x, temb, adj, w1, b1, wt, bt, w2, b2):
    """Pure-JAX reference matching the PyTorch module."""
    cheb = cheb_basis(adj)                               # [3, N, N]

    def chebconv(inp, w, b):
        r = jnp.einsum("knm,bmc->kbnc", cheb, inp)
        r = jnp.einsum("kbnc,kcd->bnd", r, w)
        return r + b[None, None, :]

    out = jax.nn.relu(chebconv(x, w1, b1))               # gconv1 (+ReLU)
    tproj = jax.nn.silu(temb) @ wt + bt                  # temb_proj(nonlinearity(temb))
    out = out + tproj[:, None, :]
    out = jax.nn.relu(chebconv(out, w2, b2))             # gconv2 (+ReLU)
    return x + out


if __name__ == "__main__":
    B, N = 2, 16          # batch, graph nodes (joints)
    Cin = Cout = 32       # input_dim == output_dim (residual requires this)
    H = 32                # hid_dim
    E = 32                # emd_dim

    key = jax.random.PRNGKey(0)
    ks = jax.random.split(key, 8)

    x = jax.random.normal(ks[0], (B, N, Cin), jnp.float32)
    temb = jax.random.normal(ks[1], (B, E), jnp.float32)

    # symmetric positive adjacency with self-loops (deterministic)
    a = jax.random.uniform(ks[2], (N, N), jnp.float32)
    adj = 0.5 * (a + a.T) + jnp.eye(N, dtype=jnp.float32)

    # parameters (deterministic synthetic init)
    w1 = 0.1 * jax.random.normal(ks[3], (K_CHEB, Cin, H), jnp.float32)
    b1 = jnp.zeros((H,), jnp.float32)
    wt = 0.1 * jax.random.normal(ks[4], (E, H), jnp.float32)
    bt = 0.01 * jax.random.normal(ks[5], (H,), jnp.float32)
    w2 = 0.1 * jax.random.normal(ks[6], (K_CHEB, H, Cout), jnp.float32)
    b2 = jnp.zeros((Cout,), jnp.float32)

    out = res_cheb_gc_diff(x, temb, adj, w1, b1, wt, bt, w2, b2)
    out = jax.block_until_ready(out)

    ref = reference(x, temb, adj, w1, b1, wt, bt, w2, b2)
    assert out.shape == (B, N, Cout)
    assert jnp.allclose(out, ref, atol=1e-4, rtol=1e-4), (
        float(jnp.max(jnp.abs(out - ref)))
    )
    print("KERNEL_OK")
</pallas_src>

<mosaic_0001>
module attributes {stable_mosaic.version = 11 : i64} {
  func.func @_res_cheb_gc_diff_kernel(%arg0: i32, %arg1: memref<32x32xf32, #tpu.memory_space<vmem>>, %arg2: memref<64x32xf32, #tpu.memory_space<vmem>>, %arg3: memref<3x32x32xf32, #tpu.memory_space<vmem>>, %arg4: memref<1x32xf32, #tpu.memory_space<vmem>>, %arg5: memref<32x32xf32, #tpu.memory_space<vmem>>, %arg6: memref<3x32x32xf32, #tpu.memory_space<vmem>>, %arg7: memref<1x32xf32, #tpu.memory_space<vmem>>, %arg8: memref<32x32xf32, #tpu.memory_space<vmem>>) attributes {dimension_semantics = [#tpu.dimension_semantics<arbitrary>], iteration_bounds = array<i64: 1>, scalar_prefetch = 0 : i64, scratch_operands = 0 : i64, tpu.core_type = #tpu.core_type<tc>, window_params = [{pipeline_mode = #tpu.pipeline_mode<synchronous>, transform_indices = @transform_0, window_bounds = array<i64: 32, 32>}, {pipeline_mode = #tpu.pipeline_mode<synchronous>, transform_indices = @transform_1, window_bounds = array<i64: 64, 32>}, {pipeline_mode = #tpu.pipeline_mode<synchronous>, transform_indices = @transform_2, window_bounds = array<i64: 3, 32, 32>}, {pipeline_mode = #tpu.pipeline_mode<synchronous>, transform_indices = @transform_3, window_bounds = array<i64: 1, 32>}, {pipeline_mode = #tpu.pipeline_mode<synchronous>, transform_indices = @transform_4, window_bounds = array<i64: 32, 32>}, {pipeline_mode = #tpu.pipeline_mode<synchronous>, transform_indices = @transform_5, window_bounds = array<i64: 3, 32, 32>}, {pipeline_mode = #tpu.pipeline_mode<synchronous>, transform_indices = @transform_6, window_bounds = array<i64: 1, 32>}, {pipeline_mode = #tpu.pipeline_mode<synchronous>, transform_indices = @transform_7, window_bounds = array<i64: 32, 32>}]} {
    %c0 = arith.constant 0 : index
    %c0_0 = arith.constant 0 : index
    %0 = vector.load %arg1[%c0, %c0_0] : memref<32x32xf32, #tpu.memory_space<vmem>>, vector<32x32xf32>
    %c0_1 = arith.constant 0 : index
    %c0_2 = arith.constant 0 : index
    %1 = vector.load %arg2[%c0_1, %c0_2] : memref<64x32xf32, #tpu.memory_space<vmem>>, vector<64x32xf32>
    %cst = arith.constant dense<0.000000e+00> : vector<64x32xf32>
    %2 = tpu.matmul %1, %0, %cst {dimension_numbers = #tpu.dot_dimension_numbers<[1], [0], [0], [1], [0, 0, 1, 1], [], []>} : vector<64x32xf32>, vector<32x32xf32>, vector<64x32xf32> -> vector<64x32xf32>
    %c0_3 = arith.constant 0 : index
    %c0_4 = arith.constant 0 : index
    %c0_5 = arith.constant 0 : index
    %3 = vector.load %arg3[%c0_3, %c0_4, %c0_5] : memref<3x32x32xf32, #tpu.memory_space<vmem>>, vector<1x32x32xf32>
    %4 = vector.shape_cast %3 : vector<1x32x32xf32> to vector<32x32xf32>
    %cst_6 = arith.constant dense<0.000000e+00> : vector<32x32xf32>
    %5 = tpu.matmul %0, %4, %cst_6 {dimension_numbers = #tpu.dot_dimension_numbers<[1], [0], [0], [1], [0, 0, 1, 1], [], []>} : vector<32x32xf32>, vector<32x32xf32>, vector<32x32xf32> -> vector<32x32xf32>
    %6 = vector.extract_strided_slice %2 {offsets = [0, 0], sizes = [32, 32], strides = [1, 1]} : vector<64x32xf32> to vector<32x32xf32>
    %c1 = arith.constant 1 : index
    %c0_7 = arith.constant 0 : index
    %c0_8 = arith.constant 0 : index
    %7 = vector.load %arg3[%c1, %c0_7, %c0_8] : memref<3x32x32xf32, #tpu.memory_space<vmem>>, vector<1x32x32xf32>
    %8 = vector.shape_cast %7 : vector<1x32x32xf32> to vector<32x32xf32>
    %cst_9 = arith.constant dense<0.000000e+00> : vector<32x32xf32>
    %9 = tpu.matmul %6, %8, %cst_9 {dimension_numbers = #tpu.dot_dimension_numbers<[1], [0], [0], [1], [0, 0, 1, 1], [], []>} : vector<32x32xf32>, vector<32x32xf32>, vector<32x32xf32> -> vector<32x32xf32>
    %10 = arith.addf %5, %9 : vector<32x32xf32>
    %11 = vector.extract_strided_slice %2 {offsets = [32, 0], sizes = [32, 32], strides = [1, 1]} : vector<64x32xf32> to vector<32x32xf32>
    %c2 = arith.constant 2 : index
    %c0_10 = arith.constant 0 : index
    %c0_11 = arith.constant 0 : index
    %12 = vector.load %arg3[%c2, %c0_10, %c0_11] : memref<3x32x32xf32, #tpu.memory_space<vmem>>, vector<1x32x32xf32>
    %13 = vector.shape_cast %12 : vector<1x32x32xf32> to vector<32x32xf32>
    %cst_12 = arith.constant dense<0.000000e+00> : vector<32x32xf32>
    %14 = tpu.matmul %11, %13, %cst_12 {dimension_numbers = #tpu.dot_dimension_numbers<[1], [0], [0], [1], [0, 0, 1, 1], [], []>} : vector<32x32xf32>, vector<32x32xf32>, vector<32x32xf32> -> vector<32x32xf32>
    %15 = arith.addf %10, %14 : vector<32x32xf32>
    %c0_13 = arith.constant 0 : index
    %c0_14 = arith.constant 0 : index
    %16 = vector.load %arg4[%c0_13, %c0_14] : memref<1x32xf32, #tpu.memory_space<vmem>>, vector<1x32xf32>
    %17 = vector.broadcast %16 : vector<1x32xf32> to vector<32x32xf32>
    %18 = arith.addf %15, %17 : vector<32x32xf32>
    %cst_15 = arith.constant 0.000000e+00 : f32
    %19 = vector.broadcast %cst_15 : f32 to vector<32x32xf32>
    %20 = arith.maximumf %18, %19 : vector<32x32xf32>
    %c0_16 = arith.constant 0 : index
    %c0_17 = arith.constant 0 : index
    %21 = vector.load %arg5[%c0_16, %c0_17] : memref<32x32xf32, #tpu.memory_space<vmem>>, vector<32x32xf32>
    %22 = arith.addf %20, %21 : vector<32x32xf32>
    %c0_18 = arith.constant 0 : index
    %c0_19 = arith.constant 0 : index
    %23 = vector.load %arg2[%c0_18, %c0_19] : memref<64x32xf32, #tpu.memory_space<vmem>>, vector<64x32xf32>
    %cst_20 = arith.constant dense<0.000000e+00> : vector<64x32xf32>
    %24 = tpu.matmul %23, %22, %cst_20 {dimension_numbers = #tpu.dot_dimension_numbers<[1], [0], [0], [1], [0, 0, 1, 1], [], []>} : vector<64x32xf32>, vector<32x32xf32>, vector<64x32xf32> -> vector<64x32xf32>
    %c0_21 = arith.constant 0 : index
    %c0_22 = arith.constant 0 : index
    %c0_23 = arith.constant 0 : index
    %25 = vector.load %arg6[%c0_21, %c0_22, %c0_23] : memref<3x32x32xf32, #tpu.memory_space<vmem>>, vector<1x32x32xf32>
    %26 = vector.shape_cast %25 : vector<1x32x32xf32> to vector<32x32xf32>
    %cst_24 = arith.constant dense<0.000000e+00> : vector<32x32xf32>
    %27 = tpu.matmul %22, %26, %cst_24 {dimension_numbers = #tpu.dot_dimension_numbers<[1], [0], [0], [1], [0, 0, 1, 1], [], []>} : vector<32x32xf32>, vector<32x32xf32>, vector<32x32xf32> -> vector<32x32xf32>
    %28 = vector.extract_strided_slice %24 {offsets = [0, 0], sizes = [32, 32], strides = [1, 1]} : vector<64x32xf32> to vector<32x32xf32>
    %c1_25 = arith.constant 1 : index
    %c0_26 = arith.constant 0 : index
    %c0_27 = arith.constant 0 : index
    %29 = vector.load %arg6[%c1_25, %c0_26, %c0_27] : memref<3x32x32xf32, #tpu.memory_space<vmem>>, vector<1x32x32xf32>
    %30 = vector.shape_cast %29 : vector<1x32x32xf32> to vector<32x32xf32>
    %cst_28 = arith.constant dense<0.000000e+00> : vector<32x32xf32>
    %31 = tpu.matmul %28, %30, %cst_28 {dimension_numbers = #tpu.dot_dimension_numbers<[1], [0], [0], [1], [0, 0, 1, 1], [], []>} : vector<32x32xf32>, vector<32x32xf32>, vector<32x32xf32> -> vector<32x32xf32>
    %32 = arith.addf %27, %31 : vector<32x32xf32>
    %33 = vector.extract_strided_slice %24 {offsets = [32, 0], sizes = [32, 32], strides = [1, 1]} : vector<64x32xf32> to vector<32x32xf32>
    %c2_29 = arith.constant 2 : index
    %c0_30 = arith.constant 0 : index
    %c0_31 = arith.constant 0 : index
    %34 = vector.load %arg6[%c2_29, %c0_30, %c0_31] : memref<3x32x32xf32, #tpu.memory_space<vmem>>, vector<1x32x32xf32>
    %35 = vector.shape_cast %34 : vector<1x32x32xf32> to vector<32x32xf32>
    %cst_32 = arith.constant dense<0.000000e+00> : vector<32x32xf32>
    %36 = tpu.matmul %33, %35, %cst_32 {dimension_numbers = #tpu.dot_dimension_numbers<[1], [0], [0], [1], [0, 0, 1, 1], [], []>} : vector<32x32xf32>, vector<32x32xf32>, vector<32x32xf32> -> vector<32x32xf32>
    %37 = arith.addf %32, %36 : vector<32x32xf32>
    %c0_33 = arith.constant 0 : index
    %c0_34 = arith.constant 0 : index
    %38 = vector.load %arg7[%c0_33, %c0_34] : memref<1x32xf32, #tpu.memory_space<vmem>>, vector<1x32xf32>
    %39 = vector.broadcast %38 : vector<1x32xf32> to vector<32x32xf32>
    %40 = arith.addf %37, %39 : vector<32x32xf32>
    %cst_35 = arith.constant 0.000000e+00 : f32
    %41 = vector.broadcast %cst_35 : f32 to vector<32x32xf32>
    %42 = arith.maximumf %40, %41 : vector<32x32xf32>
    %43 = arith.addf %0, %42 : vector<32x32xf32>
    %c0_36 = arith.constant 0 : index
    %c0_37 = arith.constant 0 : index
    %44 = vector.load %arg8[%c0_36, %c0_37] : memref<32x32xf32, #tpu.memory_space<vmem>>, vector<32x32xf32>
    tpu.vector_store %arg8[%c0_36, %c0_37], %43 {strides = array<i32>} : memref<32x32xf32, #tpu.memory_space<vmem>>, vector<32x32xf32>,
    return
  }
  func.func @transform_0(%arg0: i32) -> (i32, i32) {
    %c0_i32 = arith.constant 0 : i32
    %c0_i32_0 = arith.constant 0 : i32
    %c0_i32_1 = arith.constant 0 : i32
    return %c0_i32, %c0_i32_0 : i32, i32
  }
  func.func @transform_1(%arg0: i32) -> (i32, i32) {
    %c0_i32 = arith.constant 0 : i32
    %c0_i32_0 = arith.constant 0 : i32
    %c0_i32_1 = arith.constant 0 : i32
    return %c0_i32, %c0_i32_0 : i32, i32
  }
  func.func @transform_2(%arg0: i32) -> (i32, i32, i32) {
    %c0_i32 = arith.constant 0 : i32
    %c0_i32_0 = arith.constant 0 : i32
    %c0_i32_1 = arith.constant 0 : i32
    %c0_i32_2 = arith.constant 0 : i32
    return %c0_i32, %c0_i32_0, %c0_i32_1 : i32, i32, i32
  }
  func.func @transform_3(%arg0: i32) -> (i32, i32) {
    %c0_i32 = arith.constant 0 : i32
    %c0_i32_0 = arith.constant 0 : i32
    %c0_i32_1 = arith.constant 0 : i32
    return %c0_i32, %c0_i32_0 : i32, i32
  }
  func.func @transform_4(%arg0: i32) -> (i32, i32) {
    %c0_i32 = arith.constant 0 : i32
    %c0_i32_0 = arith.constant 0 : i32
    %c0_i32_1 = arith.constant 0 : i32
    return %c0_i32, %c0_i32_0 : i32, i32
  }
  func.func @transform_5(%arg0: i32) -> (i32, i32, i32) {
    %c0_i32 = arith.constant 0 : i32
    %c0_i32_0 = arith.constant 0 : i32
    %c0_i32_1 = arith.constant 0 : i32
    %c0_i32_2 = arith.constant 0 : i32
    return %c0_i32, %c0_i32_0, %c0_i32_1 : i32, i32, i32
  }
  func.func @transform_6(%arg0: i32) -> (i32, i32) {
    %c0_i32 = arith.constant 0 : i32
    %c0_i32_0 = arith.constant 0 : i32
    %c0_i32_1 = arith.constant 0 : i32
    return %c0_i32, %c0_i32_0 : i32, i32
  }
  func.func @transform_7(%arg0: i32) -> (i32, i32) {
    %c0_i32 = arith.constant 0 : i32
    %c0_i32_0 = arith.constant 0 : i32
    %c0_i32_1 = arith.constant 0 : i32
    return %c0_i32, %c0_i32_0 : i32, i32
  }
}

</mosaic_0001>

<llo_original>
// kernel: res_cheb_gc_diff.1
$region0: #{res_cheb_gc_diff.1}
  #allocation0 [shape = 'u32[]', space=smem, size = 0x4, offset = 0x4, fixed_abs, tag = 'smem constant byte address 0x4 - core index']
  #allocation1 [shape = 'u32[72,128]{1,0:T(1,128)}', space=vmem, size = 0x9000, scoped, tag = 'internal scratch']
  %s0 = inlined_call_operand.vmem [shape: f32[32,32], index: 0, kind: input, shape index: {}]
  %s1 = inlined_call_operand.vmem [shape: f32[64,32], index: 1, kind: input, shape index: {}]
  %s2 = inlined_call_operand.vmem [shape: f32[3,32,32], index: 2, kind: input, shape index: {}]
  %s3 = inlined_call_operand.vmem [shape: f32[1,32], index: 3, kind: input, shape index: {}]
  %s4 = inlined_call_operand.vmem [shape: f32[32,32], index: 4, kind: input, shape index: {}]
  %s5 = inlined_call_operand.vmem [shape: f32[3,32,32], index: 5, kind: input, shape index: {}]
  %s6 = inlined_call_operand.vmem [shape: f32[1,32], index: 6, kind: input, shape index: {}]
  %s7 = inlined_call_operand.hbm [shape: f32[32,32], index: 7, kind: output, shape index: {}]
  %s8 = sld [smem:[#allocation0]]
  $region38: #{res_cheb_gc_diff.1} parent=0
    _
  %s10 = ssub.s32 1, %s8
  %s11 = scalar_select 0, %s10, %s8
  $region1: #{res_cheb_gc_diff.1} parent=0
    #allocation2 [shape = 'u8[16384]{0}', space=vmem, size = 0x4000, scoped, tag = 'output window, operand 0, single buffered']
    #allocation3 [shape = 's32[1]{0}', space=sflag, size = 0x4, scoped, tag = 'scoped memory for res_cheb_gc_diff.1']
    %12 = vsyncpa [#allocation3], 0
    // Predicated region
    $region2: #{res_cheb_gc_diff.1} parent=1 // pred_check
      _
    $region3: #{res_cheb_gc_diff.1} parent=1 // pred_check_branch
      %14 = sbr.rel (0) target = $region5
    $region4: #{res_cheb_gc_diff.1} parent=1 // pred_region
      _
    $region5: #{res_cheb_gc_diff.1} parent=1 // pred_fallthru
      _
    // Predicated region
    $region6: #{res_cheb_gc_diff.1} parent=1 // pred_check
      _
    $region7: #{res_cheb_gc_diff.1} parent=1 // pred_check_branch
      %16 = sbr.rel (0) target = $region9
    $region8: #{res_cheb_gc_diff.1} parent=1 // pred_region
      _
    $region9: #{res_cheb_gc_diff.1} parent=1 // pred_fallthru
      _
    // Predicated region
    $region10: #{res_cheb_gc_diff.1} parent=1 // pred_check
      _
    $region11: #{res_cheb_gc_diff.1} parent=1 // pred_check_branch
      %18 = sbr.rel (0) target = $region13
    $region12: #{res_cheb_gc_diff.1} parent=1 // pred_region
      _
    $region13: #{res_cheb_gc_diff.1} parent=1 // pred_fallthru
      _
    // Predicated region
    $region14: #{res_cheb_gc_diff.1} parent=1 // pred_check
      _
    $region15: #{res_cheb_gc_diff.1} parent=1 // pred_check_branch
      %20 = sbr.rel (0) target = $region17
    $region16: #{res_cheb_gc_diff.1} parent=1 // pred_region
      _
    $region17: #{res_cheb_gc_diff.1} parent=1 // pred_fallthru
      _
    // Predicated region
    $region18: #{res_cheb_gc_diff.1} parent=1 // pred_check
      _
    $region19: #{res_cheb_gc_diff.1} parent=1 // pred_check_branch
      %22 = sbr.rel (0) target = $region21
    $region20: #{res_cheb_gc_diff.1} parent=1 // pred_region
      _
    $region21: #{res_cheb_gc_diff.1} parent=1 // pred_fallthru
      _
    // Predicated region
    $region22: #{res_cheb_gc_diff.1} parent=1 // pred_check
      _
    $region23: #{res_cheb_gc_diff.1} parent=1 // pred_check_branch
      %24 = sbr.rel (0) target = $region25
    $region24: #{res_cheb_gc_diff.1} parent=1 // pred_region
      _
    $region25: #{res_cheb_gc_diff.1} parent=1 // pred_fallthru
      _
    // Predicated region
    $region26: #{res_cheb_gc_diff.1} parent=1 // pred_check
      _
    $region27: #{res_cheb_gc_diff.1} parent=1 // pred_check_branch
      %26 = sbr.rel (0) target = $region29
    $region28: #{res_cheb_gc_diff.1} parent=1 // pred_region
      _
    $region29: #{res_cheb_gc_diff.1} parent=1 // pred_fallthru
      _
    %v27 = vld [vmem:[%s0] sm:$0xff]
    %v28 = vld [vmem:[%s0 + $0x8] sm:$0xff]
    %v29 = vld [vmem:[%s0 + $0x10] sm:$0xff]
    %v30 = vld [vmem:[%s0 + $0x18] sm:$0xff]
    %v31 = vld [vmem:[%s1] sm:$0xff]
    %v32 = vld [vmem:[%s1 + $0x8] sm:$0xff]
    %v33 = vld [vmem:[%s1 + $0x10] sm:$0xff]
    %v34 = vld [vmem:[%s1 + $0x18] sm:$0xff]
    %v35 = vld [vmem:[%s1 + $0x20] sm:$0xff]
    %v36 = vld [vmem:[%s1 + $0x28] sm:$0xff]
    %v37 = vld [vmem:[%s1 + $0x30] sm:$0xff]
    %v38 = vld [vmem:[%s1 + $0x38] sm:$0xff]
    %vm39 = vcmask 261120
    %v41 = vsel %vm39, %v31, 0
    %v44 = vsel %vm39, %v32, 0
    %v47 = vsel %vm39, %v33, 0
    %v50 = vsel %vm39, %v34, 0
    %v53 = vsel %vm39, %v35, 0
    %v56 = vsel %vm39, %v36, 0
    %v59 = vsel %vm39, %v37, 0
    %v62 = vsel %vm39, %v38, 0
    %64 = vmatpush.msra.mxu0 0.0
    %65 = vmatpush.msra.mxu0 0.0
    %66 = vmatpush.msra.mxu0 0.0
    %67 = vmatpush.msra.mxu0 0.0
    %68 = vmatpush.msra.mxu0 0.0
    %69 = vmatpush.msra.mxu0 0.0
    %70 = vmatpush.msra.mxu0 0.0
    %71 = vmatpush.msra.mxu0 0.0
    %72 = vmatpush.msra.mxu0 0.0
    %73 = vmatpush.msra.mxu0 0.0
    %74 = vmatpush.msra.mxu0 0.0
    %75 = vmatpush.msra.mxu0 0.0
    %76 = vmatpush.msra.mxu0 %v30
    %77 = vmatpush.msra.mxu0 %v29
    %78 = vmatpush.msra.mxu0 %v28
    %79 = vmatpush.msra.mxu0 %v27
    %80 = vmatmul.f32.gmra.mxu0 %v41
    %v81 = vpop.f32.mrf.mxu0
    %v82 = vadd.f32 0.0, %v81
    %83 = vmatmul.f32.gmra.mxu0 %v44
    %v84 = vpop.f32.mrf.mxu0
    %v85 = vadd.f32 0.0, %v84
    %86 = vmatmul.f32.gmra.mxu0 %v47
    %v87 = vpop.f32.mrf.mxu0
    %v88 = vadd.f32 0.0, %v87
    %89 = vmatmul.f32.gmra.mxu0 %v50
    %v90 = vpop.f32.mrf.mxu0
    %v91 = vadd.f32 0.0, %v90
    %92 = vmatmul.f32.gmra.mxu0 %v53
    %v93 = vpop.f32.mrf.mxu0
    %v94 = vadd.f32 0.0, %v93
    %95 = vmatmul.f32.gmra.mxu0 %v56
    %v96 = vpop.f32.mrf.mxu0
    %v97 = vadd.f32 0.0, %v96
    %98 = vmatmul.f32.gmra.mxu0 %v59
    %v99 = vpop.f32.mrf.mxu0
    %v100 = vadd.f32 0.0, %v99
    %101 = vmatmul.f32.gmra.mxu0 %v62
    %v102 = vpop.f32.mrf.mxu0
    %v103 = vadd.f32 0.0, %v102
    %104 = vdwg.mxu0
    %v105 = vld [vmem:[%s2] sm:$0xff]
    %v106 = vld [vmem:[%s2 + $0x8] sm:$0xff]
    %v107 = vld [vmem:[%s2 + $0x10] sm:$0xff]
    %v108 = vld [vmem:[%s2 + $0x18] sm:$0xff]
    %s109 = scalar_lea.vmem %s2, 32
    %v110 = vld [vmem:[%s109] sm:$0xff]
    %v111 = vld [vmem:[%s109 + $0x8] sm:$0xff]
    %v112 = vld [vmem:[%s109 + $0x10] sm:$0xff]
    %v113 = vld [vmem:[%s109 + $0x18] sm:$0xff]
    %v115 = vsel %vm39, %v82, 0
    %v118 = vsel %vm39, %v85, 0
    %v121 = vsel %vm39, %v88, 0
    %v124 = vsel %vm39, %v91, 0
    %126 = vmatpush.msra.mxu0 0.0
    %127 = vmatpush.msra.mxu0 0.0
    %128 = vmatpush.msra.mxu0 0.0
    %129 = vmatpush.msra.mxu0 0.0
    %130 = vmatpush.msra.mxu0 0.0
    %131 = vmatpush.msra.mxu0 0.0
    %132 = vmatpush.msra.mxu0 0.0
    %133 = vmatpush.msra.mxu0 0.0
    %134 = vmatpush.msra.mxu0 0.0
    %135 = vmatpush.msra.mxu0 0.0
    %136 = vmatpush.msra.mxu0 0.0
    %137 = vmatpush.msra.mxu0 0.0
    %138 = vmatpush.msra.mxu0 %v113
    %139 = vmatpush.msra.mxu0 %v112
    %140 = vmatpush.msra.mxu0 %v111
    %141 = vmatpush.msra.mxu0 %v110
    %142 = vmatmul.f32.gmra.mxu0 %v115
    %v143 = vpop.f32.mrf.mxu0
    %v144 = vadd.f32 0.0, %v143
    %145 = vmatmul.f32.gmra.mxu0 %v118
    %v146 = vpop.f32.mrf.mxu0
    %v147 = vadd.f32 0.0, %v146
    %148 = vmatmul.f32.gmra.mxu0 %v121
    %v149 = vpop.f32.mrf.mxu0
    %v150 = vadd.f32 0.0, %v149
    %151 = vmatmul.f32.gmra.mxu0 %v124
    %v152 = vpop.f32.mrf.mxu0
    %v153 = vadd.f32 0.0, %v152
    %154 = vdwg.mxu0
    %v156 = vsel %vm39, %v27, 0
    %v159 = vsel %vm39, %v28, 0
    %v162 = vsel %vm39, %v29, 0
    %v165 = vsel %vm39, %v30, 0
    %167 = vmatpush.msra.mxu0 0.0
    %168 = vmatpush.msra.mxu0 0.0
    %169 = vmatpush.msra.mxu0 0.0
    %170 = vmatpush.msra.mxu0 0.0
    %171 = vmatpush.msra.mxu0 0.0
    %172 = vmatpush.msra.mxu0 0.0
    %173 = vmatpush.msra.mxu0 0.0
    %174 = vmatpush.msra.mxu0 0.0
    %175 = vmatpush.msra.mxu0 0.0
    %176 = vmatpush.msra.mxu0 0.0
    %177 = vmatpush.msra.mxu0 0.0
    %178 = vmatpush.msra.mxu0 0.0
    %179 = vmatpush.msra.mxu0 %v108
    %180 = vmatpush.msra.mxu0 %v107
    %181 = vmatpush.msra.mxu0 %v106
    %182 = vmatpush.msra.mxu0 %v105
    %183 = vmatmul.f32.gmra.mxu0 %v156
    %v184 = vpop.f32.mrf.mxu0
    %v185 = vadd.f32 %v144, %v184
    %186 = vmatmul.f32.gmra.mxu0 %v159
    %v187 = vpop.f32.mrf.mxu0
    %v188 = vadd.f32 %v147, %v187
    %189 = vmatmul.f32.gmra.mxu0 %v162
    %v190 = vpop.f32.mrf.mxu0
    %v191 = vadd.f32 %v150, %v190
    %192 = vmatmul.f32.gmra.mxu0 %v165
    %v193 = vpop.f32.mrf.mxu0
    %v194 = vadd.f32 %v153, %v193
    %195 = vdwg.mxu0
    %s196 = scalar_lea.vmem %s2, 64
    %v197 = vld [vmem:[%s196] sm:$0xff]
    %v198 = vld [vmem:[%s196 + $0x8] sm:$0xff]
    %v199 = vld [vmem:[%s196 + $0x10] sm:$0xff]
    %v200 = vld [vmem:[%s196 + $0x18] sm:$0xff]
    %v202 = vsel %vm39, %v94, 0
    %v205 = vsel %vm39, %v97, 0
    %v208 = vsel %vm39, %v100, 0
    %v211 = vsel %vm39, %v103, 0
    %213 = vmatpush.msra.mxu0 0.0
    %214 = vmatpush.msra.mxu0 0.0
    %215 = vmatpush.msra.mxu0 0.0
    %216 = vmatpush.msra.mxu0 0.0
    %217 = vmatpush.msra.mxu0 0.0
    %218 = vmatpush.msra.mxu0 0.0
    %219 = vmatpush.msra.mxu0 0.0
    %220 = vmatpush.msra.mxu0 0.0
    %221 = vmatpush.msra.mxu0 0.0
    %222 = vmatpush.msra.mxu0 0.0
    %223 = vmatpush.msra.mxu0 0.0
    %224 = vmatpush.msra.mxu0 0.0
    %225 = vmatpush.msra.mxu0 %v200
    %226 = vmatpush.msra.mxu0 %v199
    %227 = vmatpush.msra.mxu0 %v198
    %228 = vmatpush.msra.mxu0 %v197
    %229 = vmatmul.f32.gmra.mxu0 %v202
    %v230 = vpop.f32.mrf.mxu0
    %v231 = vadd.f32 0.0, %v230
    %232 = vmatmul.f32.gmra.mxu0 %v205
    %v233 = vpop.f32.mrf.mxu0
    %v234 = vadd.f32 0.0, %v233
    %235 = vmatmul.f32.gmra.mxu0 %v208
    %v236 = vpop.f32.mrf.mxu0
    %v237 = vadd.f32 0.0, %v236
    %238 = vmatmul.f32.gmra.mxu0 %v211
    %v239 = vpop.f32.mrf.mxu0
    %v240 = vadd.f32 0.0, %v239
    %241 = vdwg.mxu0
    %v242 = vadd.f32 %v185, %v231
    %v243 = vadd.f32 %v188, %v234
    %v244 = vadd.f32 %v191, %v237
    %v245 = vadd.f32 %v194, %v240
    %v246 = vld [vmem:[%s3] sm:$0x1]
    %v248 = vperm.slane %v246, 0
    %v250 = vadd.f32 %v242, %v248
    %v251 = vadd.f32 %v243, %v248
    %v252 = vadd.f32 %v244, %v248
    %v253 = vadd.f32 %v245, %v248
    %v254 = vmax.f32 %v250, 0.0
    %v255 = vmax.f32 %v251, 0.0
    %v256 = vmax.f32 %v252, 0.0
    %v257 = vmax.f32 %v253, 0.0
    %v258 = vld [vmem:[%s4] sm:$0xff]
    %v259 = vld [vmem:[%s4 + $0x8] sm:$0xff]
    %v260 = vld [vmem:[%s4 + $0x10] sm:$0xff]
    %v261 = vld [vmem:[%s4 + $0x18] sm:$0xff]
    %v262 = vadd.f32 %v254, %v258
    %v263 = vadd.f32 %v255, %v259
    %v264 = vadd.f32 %v256, %v260
    %v265 = vadd.f32 %v257, %v261
    %266 = vmatpush.msra.mxu0 0.0
    %267 = vmatpush.msra.mxu0 0.0
    %268 = vmatpush.msra.mxu0 0.0
    %269 = vmatpush.msra.mxu0 0.0
    %270 = vmatpush.msra.mxu0 0.0
    %271 = vmatpush.msra.mxu0 0.0
    %272 = vmatpush.msra.mxu0 0.0
    %273 = vmatpush.msra.mxu0 0.0
    %274 = vmatpush.msra.mxu0 0.0
    %275 = vmatpush.msra.mxu0 0.0
    %276 = vmatpush.msra.mxu0 0.0
    %277 = vmatpush.msra.mxu0 0.0
    %278 = vmatpush.msra.mxu0 %v265
    %279 = vmatpush.msra.mxu0 %v264
    %280 = vmatpush.msra.mxu0 %v263
    %281 = vmatpush.msra.mxu0 %v262
    %282 = vmatmul.f32.gmra.mxu0 %v41
    %v283 = vpop.f32.mrf.mxu0
    %v284 = vadd.f32 0.0, %v283
    %285 = vmatmul.f32.gmra.mxu0 %v44
    %v286 = vpop.f32.mrf.mxu0
    %v287 = vadd.f32 0.0, %v286
    %288 = vmatmul.f32.gmra.mxu0 %v47
    %v289 = vpop.f32.mrf.mxu0
    %v290 = vadd.f32 0.0, %v289
    %291 = vmatmul.f32.gmra.mxu0 %v50
    %v292 = vpop.f32.mrf.mxu0
    %v293 = vadd.f32 0.0, %v292
    %294 = vmatmul.f32.gmra.mxu0 %v53
    %v295 = vpop.f32.mrf.mxu0
    %v296 = vadd.f32 0.0, %v295
    %297 = vmatmul.f32.gmra.mxu0 %v56
    %v298 = vpop.f32.mrf.mxu0
    %v299 = vadd.f32 0.0, %v298
    %300 = vmatmul.f32.gmra.mxu0 %v59
    %v301 = vpop.f32.mrf.mxu0
    %v302 = vadd.f32 0.0, %v301
    %303 = vmatmul.f32.gmra.mxu0 %v62
    %v304 = vpop.f32.mrf.mxu0
    %v305 = vadd.f32 0.0, %v304
    %306 = vdwg.mxu0
    %v307 = vld [vmem:[%s5] sm:$0xff]
    %v308 = vld [vmem:[%s5 + $0x8] sm:$0xff]
    %v309 = vld [vmem:[%s5 + $0x10] sm:$0xff]
    %v310 = vld [vmem:[%s5 + $0x18] sm:$0xff]
    %s311 = scalar_lea.vmem %s5, 32
    %v312 = vld [vmem:[%s311] sm:$0xff]
    %v313 = vld [vmem:[%s311 + $0x8] sm:$0xff]
    %v314 = vld [vmem:[%s311 + $0x10] sm:$0xff]
    %v315 = vld [vmem:[%s311 + $0x18] sm:$0xff]
    %v317 = vsel %vm39, %v284, 0
    %v320 = vsel %vm39, %v287, 0
    %v323 = vsel %vm39, %v290, 0
    %v326 = vsel %vm39, %v293, 0
    %328 = vmatpush.msra.mxu0 0.0
    %329 = vmatpush.msra.mxu0 0.0
    %330 = vmatpush.msra.mxu0 0.0
    %331 = vmatpush.msra.mxu0 0.0
    %332 = vmatpush.msra.mxu0 0.0
    %333 = vmatpush.msra.mxu0 0.0
    %334 = vmatpush.msra.mxu0 0.0
    %335 = vmatpush.msra.mxu0 0.0
    %336 = vmatpush.msra.mxu0 0.0
    %337 = vmatpush.msra.mxu0 0.0
    %338 = vmatpush.msra.mxu0 0.0
    %339 = vmatpush.msra.mxu0 0.0
    %340 = vmatpush.msra.mxu0 %v315
    %341 = vmatpush.msra.mxu0 %v314
    %342 = vmatpush.msra.mxu0 %v313
    %343 = vmatpush.msra.mxu0 %v312
    %344 = vmatmul.f32.gmra.mxu0 %v317
    %v345 = vpop.f32.mrf.mxu0
    %v346 = vadd.f32 0.0, %v345
    %347 = vmatmul.f32.gmra.mxu0 %v320
    %v348 = vpop.f32.mrf.mxu0
    %v349 = vadd.f32 0.0, %v348
    %350 = vmatmul.f32.gmra.mxu0 %v323
    %v351 = vpop.f32.mrf.mxu0
    %v352 = vadd.f32 0.0, %v351
    %353 = vmatmul.f32.gmra.mxu0 %v326
    %v354 = vpop.f32.mrf.mxu0
    %v355 = vadd.f32 0.0, %v354
    %356 = vdwg.mxu0
    %v358 = vsel %vm39, %v262, 0
    %v361 = vsel %vm39, %v263, 0
    %v364 = vsel %vm39, %v264, 0
    %v367 = vsel %vm39, %v265, 0
    %369 = vmatpush.msra.mxu0 0.0
    %370 = vmatpush.msra.mxu0 0.0
    %371 = vmatpush.msra.mxu0 0.0
    %372 = vmatpush.msra.mxu0 0.0
    %373 = vmatpush.msra.mxu0 0.0
    %374 = vmatpush.msra.mxu0 0.0
    %375 = vmatpush.msra.mxu0 0.0
    %376 = vmatpush.msra.mxu0 0.0
    %377 = vmatpush.msra.mxu0 0.0
    %378 = vmatpush.msra.mxu0 0.0
    %379 = vmatpush.msra.mxu0 0.0
    %380 = vmatpush.msra.mxu0 0.0
    %381 = vmatpush.msra.mxu0 %v310
    %382 = vmatpush.msra.mxu0 %v309
    %383 = vmatpush.msra.mxu0 %v308
    %384 = vmatpush.msra.mxu0 %v307
    %385 = vmatmul.f32.gmra.mxu0 %v358
    %v386 = vpop.f32.mrf.mxu0
    %v387 = vadd.f32 %v346, %v386
    %388 = vmatmul.f32.gmra.mxu0 %v361
    %v389 = vpop.f32.mrf.mxu0
    %v390 = vadd.f32 %v349, %v389
    %391 = vmatmul.f32.gmra.mxu0 %v364
    %v392 = vpop.f32.mrf.mxu0
    %v393 = vadd.f32 %v352, %v392
    %394 = vmatmul.f32.gmra.mxu0 %v367
    %v395 = vpop.f32.mrf.mxu0
    %v396 = vadd.f32 %v355, %v395
    %397 = vdwg.mxu0
    %s398 = scalar_lea.vmem %s5, 64
    %v399 = vld [vmem:[%s398] sm:$0xff]
    %v400 = vld [vmem:[%s398 + $0x8] sm:$0xff]
    %v401 = vld [vmem:[%s398 + $0x10] sm:$0xff]
    %v402 = vld [vmem:[%s398 + $0x18] sm:$0xff]
    %v404 = vsel %vm39, %v296, 0
    %v407 = vsel %vm39, %v299, 0
    %v410 = vsel %vm39, %v302, 0
    %v413 = vsel %vm39, %v305, 0
    %415 = vmatpush.msra.mxu0 0.0
    %416 = vmatpush.msra.mxu0 0.0
    %417 = vmatpush.msra.mxu0 0.0
    %418 = vmatpush.msra.mxu0 0.0
    %419 = vmatpush.msra.mxu0 0.0
    %420 = vmatpush.msra.mxu0 0.0
    %421 = vmatpush.msra.mxu0 0.0
    %422 = vmatpush.msra.mxu0 0.0
    %423 = vmatpush.msra.mxu0 0.0
    %424 = vmatpush.msra.mxu0 0.0
    %425 = vmatpush.msra.mxu0 0.0
    %426 = vmatpush.msra.mxu0 0.0
    %427 = vmatpush.msra.mxu0 %v402
    %428 = vmatpush.msra.mxu0 %v401
    %429 = vmatpush.msra.mxu0 %v400
    %430 = vmatpush.msra.mxu0 %v399
    %431 = vmatmul.f32.gmra.mxu0 %v404
    %v432 = vpop.f32.mrf.mxu0
    %v433 = vadd.f32 0.0, %v432
    %434 = vmatmul.f32.gmra.mxu0 %v407
    %v435 = vpop.f32.mrf.mxu0
    %v436 = vadd.f32 0.0, %v435
    %437 = vmatmul.f32.gmra.mxu0 %v410
    %v438 = vpop.f32.mrf.mxu0
    %v439 = vadd.f32 0.0, %v438
    %440 = vmatmul.f32.gmra.mxu0 %v413
    %v441 = vpop.f32.mrf.mxu0
    %v442 = vadd.f32 0.0, %v441
    %443 = vdwg.mxu0
    %v444 = vadd.f32 %v387, %v433
    %v445 = vadd.f32 %v390, %v436
    %v446 = vadd.f32 %v393, %v439
    %v447 = vadd.f32 %v396, %v442
    %v448 = vld [vmem:[%s6] sm:$0x1]
    %v450 = vperm.slane %v448, 0
    %v452 = vadd.f32 %v444, %v450
    %v453 = vadd.f32 %v445, %v450
    %v454 = vadd.f32 %v446, %v450
    %v455 = vadd.f32 %v447, %v450
    %v456 = vmax.f32 %v452, 0.0
    %v457 = vmax.f32 %v453, 0.0
    %v458 = vmax.f32 %v454, 0.0
    %v459 = vmax.f32 %v455, 0.0
    %v460 = vadd.f32 %v27, %v456
    %v461 = vadd.f32 %v28, %v457
    %v462 = vadd.f32 %v29, %v458
    %v463 = vadd.f32 %v30, %v459
    %464 = vst.msk [vmem:[#allocation2] sm:$0xff] %vm39, %v460
    %465 = vst.msk [vmem:[#allocation2 + $0x8] sm:$0xff] %vm39, %v461
    %466 = vst.msk [vmem:[#allocation2 + $0x10] sm:$0xff] %vm39, %v462
    %467 = vst.msk [vmem:[#allocation2 + $0x18] sm:$0xff] %vm39, %v463
    // Predicated region
    $region30: #{res_cheb_gc_diff.1} parent=1 // pred_check
      _
    $region31: #{res_cheb_gc_diff.1} parent=1 // pred_check_branch
      %469 = sbr.rel (0) target = $region33
    $region32: #{res_cheb_gc_diff.1} parent=1 // pred_region
      %471 = vsyncadd [#allocation3], 0
      %s472 = sshll.u32 [#allocation2], 4
      %s473 = int_to_ptr.vmem [resolvable:$true] %s472
      %s474 = sshll.u32 %s7, 4
      %s475 = int_to_ptr.hbm [resolvable:$true] %s474
      %480 = dma.vmem_to_hbm [thread:$0]  %s473, 512, %s475, [#allocation3], 128, 128, 8
    $region33: #{res_cheb_gc_diff.1} parent=1 // pred_fallthru
      _
    // Predicated region
    $region34: #{res_cheb_gc_diff.1} parent=1 // pred_check
      _
    $region35: #{res_cheb_gc_diff.1} parent=1 // pred_check_branch
      %482 = sbr.rel (0) target = $region37
    $region36: #{res_cheb_gc_diff.1} parent=1 // pred_region
      %484 = dma.done [#allocation3], 512
    $region37: #{res_cheb_gc_diff.1} parent=1 // pred_fallthru
      _
    %485 = vsyncpa [#allocation3], 1

</llo_original>
